<compile_context>
chip_gen: v5e
topology: v5e:2x2
jax: 0.10.0
libtpu: 0.0.40
codegen_flags: <defaults>
</compile_context>

<pallas_src>
import math

import jax
import jax.numpy as jnp
from jax.experimental import pallas as pl
from jax.experimental.pallas import tpu as pltpu


IN_DIM = 251   # nn.Linear(251, 100) fan-in
OUT_DIM = 100  # fan-out


def _round_up(v, m):
    return (v + m - 1) // m * m


def _linear_kernel(x_ref, w_ref, b_ref, o_ref):
    # [TILE_B, K] @ [K, N] -> [TILE_B, N], f32 accumulation on the MXU.
    acc = jnp.dot(x_ref[...], w_ref[...], preferred_element_type=jnp.float32)
    o_ref[...] = (acc + b_ref[...]).astype(o_ref.dtype)


def linear_to_100_forward(x, w, b, *, out_features=OUT_DIM, tile_b=8192,
                          xla_fallback_batch=512):
    """x: [B, 251] f32, w: [251, N] f32, b: [1, N] f32 -> [B, out_features] f32.

    N may be 100 (exact) or a zero-padded width (e.g. 128 for lane-dense
    stores); the result is sliced back to `out_features` columns.
    """
    B, K = x.shape
    Np = w.shape[1]
    assert K == w.shape[0] and b.shape == (1, Np) and Np >= out_features

    # Tiny batches: plain XLA matmul (pallas_call fixed cost would dominate,
    # and XLA fuses this into neighbors for free).
    if B <= xla_fallback_batch:
        y = x @ w + b
        return y if Np == out_features else y[:, :out_features]

    # ---- Batch tile selection -------------------------------------------
    # Keep tb a multiple of 8 (sublane constraint) and aim for >= 8 grid
    # steps so the DMA pipeline overlaps and v7x megacore sharding engages;
    # cap at tile_b to bound the VMEM footprint.
    tile_b = max(8, _round_up(tile_b, 8))
    if B <= 8:
        tb = B                       # single full block (block dim == array dim)
    else:
        target = _round_up(pl.cdiv(B, 8), 8)
        tb = max(8, min(tile_b, target))
    grid = (pl.cdiv(B, tb),)
    # NOTE: when B % tb != 0 the last step's OOB rows only feed masked output
    # writes, so results stay correct.

    # ---- Explicit scoped-VMEM budget for this tile -----------------------
    lanes_k = _round_up(K, 128)      # 251 -> 256 lanes in VMEM layout
    lanes_n = _round_up(Np, 128)     # 100 -> 128 lanes
    bytes_needed = (
        2 * tb * lanes_k * 4                      # x, double-buffered
        + 2 * tb * lanes_n * 4                    # out, double-buffered
        + 2 * _round_up(K, 8) * lanes_n * 4       # resident weight
        + 2 * 8 * lanes_n * 4                     # resident bias
    )
    vmem_limit = min(int(bytes_needed * 1.25) + (1 << 20), 96 * 1024 * 1024)

    cost = pl.CostEstimate(
        flops=2 * B * K * Np,
        transcendentals=0,
        bytes_accessed=4 * (B * K + K * Np + B * Np + Np),
    )

    out = pl.pallas_call(
        _linear_kernel,
        out_shape=jax.ShapeDtypeStruct((B, Np), jnp.float32),
        grid_spec=pltpu.PrefetchScalarGridSpec(
            num_scalar_prefetch=0,
            grid=grid,
            in_specs=[
                # x: one batch tile per grid step (pipelined / double-buffered).
                pl.BlockSpec((tb, K), lambda i: (i, 0)),
                # Weight and bias: constant index map -> resident across steps.
                pl.BlockSpec((K, Np), lambda i: (0, 0)),
                pl.BlockSpec((1, Np), lambda i: (0, 0)),
            ],
            out_specs=pl.BlockSpec((tb, Np), lambda i: (i, 0)),
        ),
        compiler_params=pltpu.CompilerParams(
            # Batch tiles are independent -> shard across TCs on v7x megacore.
            dimension_semantics=("parallel",),
            vmem_limit_bytes=vmem_limit,
        ),
        cost_estimate=cost,
    )(x, w, b)

    return out if Np == out_features else out[:, :out_features]


def init_params(key, pad_out_to=None):
    """Deterministic params mimicking nn.Linear default init
    (uniform in [-1/sqrt(fan_in), 1/sqrt(fan_in)]), stored pre-transposed.
    If pad_out_to is given (e.g. 128), the extra output columns are zero."""
    kw, kb = jax.random.split(key)
    bound = 1.0 / math.sqrt(IN_DIM)
    w = jax.random.uniform(kw, (IN_DIM, OUT_DIM), jnp.float32,
                           minval=-bound, maxval=bound)
    b = jax.random.uniform(kb, (1, OUT_DIM), jnp.float32,
                           minval=-bound, maxval=bound)
    if pad_out_to is not None and pad_out_to > OUT_DIM:
        pad = pad_out_to - OUT_DIM
        w = jnp.pad(w, ((0, 0), (0, pad)))
        b = jnp.pad(b, ((0, 0), (0, pad)))
    return w, b


def reference_forward(x, w, b):
    return x @ w + b


if __name__ == "__main__":
    key = jax.random.PRNGKey(0)
    kx, kp = jax.random.split(key)

    # Small shapes consistent with the module: batch=16, features=251.
    B = 16
    x = jax.random.normal(kx, (B, IN_DIM), jnp.float32)
    w, b = init_params(kp)
    ref = reference_forward(x, w, b)

    # 1) Pallas path forced (xla_fallback_batch=0), small tile so the demo
    #    exercises a multi-step grid (grid=(2,)) with resident weights.
    out = linear_to_100_forward(x, w, b, tile_b=8, xla_fallback_batch=0)
    out = jax.block_until_ready(out)
    assert out.shape == (B, OUT_DIM)
    assert jnp.allclose(out, ref, atol=1e-5, rtol=1e-5)

    # 2) Lane-dense (128-wide padded) output path, sliced back to 100 columns.
    wp, bp = init_params(kp, pad_out_to=128)
    out_p = linear_to_100_forward(x, wp, bp, tile_b=8, xla_fallback_batch=0)
    out_p = jax.block_until_ready(out_p)
    assert out_p.shape == (B, OUT_DIM)
    assert jnp.allclose(out_p, ref, atol=1e-5, rtol=1e-5)

    # 3) Default dispatch: tiny batch falls back to the fused XLA matmul.
    out_f = jax.block_until_ready(linear_to_100_forward(x, w, b))
    assert jnp.allclose(out_f, ref, atol=1e-5, rtol=1e-5)

    print("KERNEL_OK")
</pallas_src>

<mosaic_0001>
module attributes {stable_mosaic.version = 11 : i64} {
  func.func @_linear_kernel(%arg0: i32, %arg1: memref<8x251xf32, #tpu.memory_space<vmem>>, %arg2: memref<251x100xf32, #tpu.memory_space<vmem>>, %arg3: memref<1x100xf32, #tpu.memory_space<vmem>>, %arg4: memref<8x100xf32, #tpu.memory_space<vmem>>) attributes {dimension_semantics = [#tpu.dimension_semantics<parallel>], iteration_bounds = array<i64: 2>, scalar_prefetch = 0 : i64, scratch_operands = 0 : i64, tpu.core_type = #tpu.core_type<tc>, window_params = [{transform_indices = @transform_0, window_bounds = array<i64: 8, 251>}, {pipeline_mode = #tpu.pipeline_mode<synchronous>, transform_indices = @transform_1, window_bounds = array<i64: 251, 100>}, {pipeline_mode = #tpu.pipeline_mode<synchronous>, transform_indices = @transform_2, window_bounds = array<i64: 1, 100>}, {transform_indices = @transform_3, window_bounds = array<i64: 8, 100>}]} {
    %c0 = arith.constant 0 : index
    %c0_0 = arith.constant 0 : index
    %0 = vector.load %arg1[%c0, %c0_0] : memref<8x251xf32, #tpu.memory_space<vmem>>, vector<8x251xf32>
    %c0_1 = arith.constant 0 : index
    %c0_2 = arith.constant 0 : index
    %1 = vector.load %arg2[%c0_1, %c0_2] : memref<251x100xf32, #tpu.memory_space<vmem>>, vector<251x100xf32>
    %cst = arith.constant dense<0.000000e+00> : vector<8x100xf32>
    %2 = tpu.matmul %0, %1, %cst {dimension_numbers = #tpu.dot_dimension_numbers<[1], [0], [0], [1], [0, 0, 1, 1], [], []>} : vector<8x251xf32>, vector<251x100xf32>, vector<8x100xf32> -> vector<8x100xf32>
    %c0_3 = arith.constant 0 : index
    %c0_4 = arith.constant 0 : index
    %3 = vector.load %arg3[%c0_3, %c0_4] : memref<1x100xf32, #tpu.memory_space<vmem>>, vector<1x100xf32>
    %4 = vector.broadcast %3 : vector<1x100xf32> to vector<8x100xf32>
    %5 = arith.addf %2, %4 : vector<8x100xf32>
    %c0_5 = arith.constant 0 : index
    %c0_6 = arith.constant 0 : index
    %6 = vector.load %arg4[%c0_5, %c0_6] : memref<8x100xf32, #tpu.memory_space<vmem>>, vector<8x100xf32>
    tpu.vector_store %arg4[%c0_5, %c0_6], %5 {strides = array<i32>} : memref<8x100xf32, #tpu.memory_space<vmem>>, vector<8x100xf32>,
    return
  }
  func.func @transform_0(%arg0: i32) -> (i32, i32) {
    %c0_i32 = arith.constant 0 : i32
    %c0_i32_0 = arith.constant 0 : i32
    return %arg0, %c0_i32 : i32, i32
  }
  func.func @transform_1(%arg0: i32) -> (i32, i32) {
    %c0_i32 = arith.constant 0 : i32
    %c0_i32_0 = arith.constant 0 : i32
    %c0_i32_1 = arith.constant 0 : i32
    return %c0_i32, %c0_i32_0 : i32, i32
  }
  func.func @transform_2(%arg0: i32) -> (i32, i32) {
    %c0_i32 = arith.constant 0 : i32
    %c0_i32_0 = arith.constant 0 : i32
    %c0_i32_1 = arith.constant 0 : i32
    return %c0_i32, %c0_i32_0 : i32, i32
  }
  func.func @transform_3(%arg0: i32) -> (i32, i32) {
    %c0_i32 = arith.constant 0 : i32
    %c0_i32_0 = arith.constant 0 : i32
    return %arg0, %c0_i32 : i32, i32
  }
}

</mosaic_0001>

<llo_original>
// kernel: tpu_custom_call.1
$region0: #{tpu_custom_call.1}
  #allocation0 [shape = 'u32[]', space=smem, size = 0x4, offset = 0x4, fixed_abs, tag = 'smem constant byte address 0x4 - core index']
  #allocation1 [shape = 'u32[72,128]{1,0:T(1,128)}', space=vmem, size = 0x9000, scoped, tag = 'internal scratch']
  %s0 = inlined_call_operand.vmem [shape: f32[16,251], index: 0, kind: input, shape index: {}]
  %s1 = inlined_call_operand.vmem [shape: f32[251,100], index: 1, kind: input, shape index: {}]
  %s2 = inlined_call_operand.vmem [shape: f32[1,100], index: 2, kind: input, shape index: {}]
  %s3 = inlined_call_operand.hbm [shape: f32[16,100], index: 3, kind: output, shape index: {}]
  %s4 = sld [smem:[#allocation0]]
  $region45: #{tpu_custom_call.1} parent=0
    _
  %s6 = ssub.s32 1, %s4
  %s7 = scalar_select 0, %s6, %s4
  $region1: #{tpu_custom_call.1} parent=0
    #allocation2 [shape = 'u8[8192]{0}', space=vmem, size = 0x2000, scoped, tag = 'output window, operand 0']
    #allocation3 [shape = 's32[2]{0}', space=sflag, size = 0x8, scoped, tag = 'scoped memory for tpu_custom_call.1']
    %8 = vsyncpa [#allocation3], 0
    %s9 = scalar_lea.sflag [#allocation3], 1
    %10 = vsyncpa %s9, 0
    loop: start=0, step=1, limit=4
    $region2: #{tpu_custom_call.1} parent=1 // loop_pre_header
      _
    $region3: #{tpu_custom_call.1} parent=1 // loop_header
      %s12 = sphi 0, %s16
      %p13 = scmp.ge.s32.totalorder %s12, 4
      %s22 = sphi 0, %s24
      %s25 = sphi 0, %s22
      %s26 = sphi 0, %s25
      %s42 = sphi 0, %s26
      %s46 = sphi 0, %s46
      %s48 = sphi 0, %s46
      %s49 = sphi 0, %s48
      %s63 = sphi 0, %s49
      %s67 = sphi 0, %s67
      %s69 = sphi 0, %s67
      %s70 = sphi 0, %s69
      %s84 = sphi 0, %s70
      %s90 = sphi 0, %s92
      %s93 = sphi 0, %s90
      %s94 = sphi 0, %s93
      %s110 = sphi 0, %s94
    $region4: #{tpu_custom_call.1} parent=1 // loop_header_branch
      %15 = sbr.rel (%p13) target = $region8
    $region5: #{tpu_custom_call.1} parent=1 // loop_body
      %s17 = ssub.s32 %s12, 1
      %s18 = ssub.s32 %s12, 2
      %s19 = sadd.s32 %s12, 1
      %s20 = ssub.s32 %s12, %s19
      %p21 = scmp.eq.s32.totalorder %s20, 0
      %s23 = sadd.s32 %s22, 1
      %s24 = scalar_select %p21, %s22, %s23
      %p27 = pneg %p21
      %p28 = scmp.eq.s32.totalorder %s12, 1
      %p29 = por %p27, %p28
      %p30 = scmp.ne.s32.totalorder %s22, %s25
      %p31 = scmp.eq.s32.totalorder %s12, 0
      %p32 = por %p30, %p31
      %p33 = scmp.ne.s32.totalorder %s22, %s25
      %p34 = scmp.eq.s32.totalorder %s17, 1
      %p35 = por %p33, %p34
      %p36 = scmp.ne.s32.totalorder %s25, %s26
      %p37 = scmp.eq.s32.totalorder %s17, 0
      %p38 = por %p36, %p37
      %p39 = scmp.ne.s32.totalorder %s25, %s26
      %p40 = scmp.eq.s32.totalorder %s18, 1
      %p41 = por %p39, %p40
      %p43 = scmp.ne.s32.totalorder %s26, %s42
      %p44 = scmp.eq.s32.totalorder %s18, 0
      %p45 = por %p43, %p44
      %s47 = sadd.s32 %s46, 1
      %p50 = scmp.eq.s32.totalorder %s12, 1
      %p51 = scmp.ne.s32.totalorder %s46, %s48
      %p52 = scmp.eq.s32.totalorder %s12, 0
      %p53 = por %p51, %p52
      %p54 = scmp.ne.s32.totalorder %s46, %s48
      %p55 = scmp.eq.s32.totalorder %s17, 1
      %p56 = por %p54, %p55
      %p57 = scmp.ne.s32.totalorder %s48, %s49
      %p58 = scmp.eq.s32.totalorder %s17, 0
      %p59 = por %p57, %p58
      %p60 = scmp.ne.s32.totalorder %s48, %s49
      %p61 = scmp.eq.s32.totalorder %s18, 1
      %p62 = por %p60, %p61
      %p64 = scmp.ne.s32.totalorder %s49, %s63
      %p65 = scmp.eq.s32.totalorder %s18, 0
      %p66 = por %p64, %p65
      %s68 = sadd.s32 %s67, 1
      %p71 = scmp.eq.s32.totalorder %s12, 1
      %p72 = scmp.ne.s32.totalorder %s67, %s69
      %p73 = scmp.eq.s32.totalorder %s12, 0
      %p74 = por %p72, %p73
      %p75 = scmp.ne.s32.totalorder %s67, %s69
      %p76 = scmp.eq.s32.totalorder %s17, 1
      %p77 = por %p75, %p76
      %p78 = scmp.ne.s32.totalorder %s69, %s70
      %p79 = scmp.eq.s32.totalorder %s17, 0
      %p80 = por %p78, %p79
      %p81 = scmp.ne.s32.totalorder %s69, %s70
      %p82 = scmp.eq.s32.totalorder %s18, 1
      %p83 = por %p81, %p82
      %p85 = scmp.ne.s32.totalorder %s70, %s84
      %p86 = scmp.eq.s32.totalorder %s18, 0
      %p87 = por %p85, %p86
      %s88 = ssub.s32 %s12, %s19
      %p89 = scmp.eq.s32.totalorder %s88, 0
      %s91 = sadd.s32 %s90, 1
      %s92 = scalar_select %p89, %s90, %s91
      %p95 = pneg %p89
      %p96 = scmp.eq.s32.totalorder %s12, 1
      %p97 = por %p95, %p96
      %p98 = scmp.ne.s32.totalorder %s90, %s93
      %p99 = scmp.eq.s32.totalorder %s12, 0
      %p100 = por %p98, %p99
      %p101 = scmp.ne.s32.totalorder %s90, %s93
      %p102 = scmp.eq.s32.totalorder %s17, 1
      %p103 = por %p101, %p102
      %p104 = scmp.ne.s32.totalorder %s93, %s94
      %p105 = scmp.eq.s32.totalorder %s17, 0
      %p106 = por %p104, %p105
      %p107 = scmp.ne.s32.totalorder %s93, %s94
      %p108 = scmp.eq.s32.totalorder %s18, 1
      %p109 = por %p107, %p108
      %p111 = scmp.ne.s32.totalorder %s94, %s110
      %p112 = scmp.eq.s32.totalorder %s18, 0
      %p113 = por %p111, %p112
      %p114 = scmp.le.s32.totalorder 1, %s12
      %p115 = scmp.lt.s32.totalorder %s12, 3
      %p116 = pnand %p114, %p115
      %p117 = pneg %p116
      // Predicated region
      $region9: #{tpu_custom_call.1} parent=5 // pred_check
        _
      $region10: #{tpu_custom_call.1} parent=5 // pred_check_branch
        %119 = sbr.rel (%p116) target = $region12
      $region11: #{tpu_custom_call.1} parent=5 // pred_region
        %s120 = ssub.s32 %s12, 1
        // Predicated region
        $region13: #{tpu_custom_call.1} parent=11 // pred_check
          %p121 = pneg %p59
        $region14: #{tpu_custom_call.1} parent=11 // pred_check_branch
          %123 = sbr.rel (%p121) target = $region16
        $region15: #{tpu_custom_call.1} parent=11 // pred_region
          _
        $region16: #{tpu_custom_call.1} parent=11 // pred_fallthru
          _
        // Predicated region
        $region17: #{tpu_custom_call.1} parent=11 // pred_check
          %p124 = pneg %p80
        $region18: #{tpu_custom_call.1} parent=11 // pred_check_branch
          %126 = sbr.rel (%p124) target = $region20
        $region19: #{tpu_custom_call.1} parent=11 // pred_region
          _
        $region20: #{tpu_custom_call.1} parent=11 // pred_fallthru
          _
      $region12: #{tpu_custom_call.1} parent=5 // pred_fallthru
        _
      %p127 = scmp.lt.s32.totalorder %s12, 2
      // Predicated region
      $region21: #{tpu_custom_call.1} parent=5 // pred_check
        %p128 = pneg %p127
      $region22: #{tpu_custom_call.1} parent=5 // pred_check_branch
        %130 = sbr.rel (%p128) target = $region24
      $region23: #{tpu_custom_call.1} parent=5 // pred_region
        // Predicated region
        $region25: #{tpu_custom_call.1} parent=23 // pred_check
          %p131 = pneg %p32
        $region26: #{tpu_custom_call.1} parent=23 // pred_check_branch
          %133 = sbr.rel (%p131) target = $region28
        $region27: #{tpu_custom_call.1} parent=23 // pred_region
          %p134 = scmp.lt.s32.totalorder %s12, 1
          %s135 = scalar_select %p134, %s12, 1
          %s136 = smul.addr %s135, 2
          %s137 = smul.addr %s136, 8
          %s138 = scalar_lea.vmem %s0, %s137
        $region28: #{tpu_custom_call.1} parent=23 // pred_fallthru
          _
      $region24: #{tpu_custom_call.1} parent=5 // pred_fallthru
        _
      %p139 = scmp.le.s32.totalorder 1, %s12
      %p140 = scmp.lt.s32.totalorder %s12, 3
      %p141 = pnand %p139, %p140
      %p142 = pneg %p141
      // Predicated region
      $region29: #{tpu_custom_call.1} parent=5 // pred_check
        _
      $region30: #{tpu_custom_call.1} parent=5 // pred_check_branch
        %144 = sbr.rel (%p141) target = $region32
      $region31: #{tpu_custom_call.1} parent=5 // pred_region
        %s145 = ssub.s32 %s12, 1
        %p146 = scmp.lt.s32.totalorder %s17, 1
        %s147 = scalar_select %p146, %s17, 1
        %s148 = smul.addr %s147, 2
        %s149 = smul.addr %s148, 8
        %s150 = scalar_lea.vmem %s0, %s149
        %p151 = pneg %p38
        %p152 = pneg %p35
        %p153 = pneg %p59
        %p154 = pneg %p56
        %p155 = pneg %p80
        %p156 = pneg %p77
        %p157 = pneg %p106
        %p158 = pneg %p103
        %s159 = sand.u32 %s93, 1
        %s160 = scalar_lea.sflag [#allocation3], %s159
        %s161 = sand.u32 %s93, 1
        %s162 = smul.addr %s161, 8
        %s163 = scalar_lea.vmem [#allocation2], %s162
        %p164 = scmp.lt.s32.totalorder %s17, 1
        %s165 = scalar_select %p164, %s17, 1
        %s166 = smul.addr %s165, 2
        %s167 = smul.addr %s166, 8
        %s168 = scalar_lea.vmem %s0, %s167
        %v169 = vld [vmem:[%s168] sm:$0xff]
        %v170 = vld [vmem:[%s168 + $0x8] sm:$0xff]
        %v171 = vld [vmem:[%s1] sm:$0xff]
        %v172 = vld [vmem:[%s1 + $0x8] sm:$0xff]
        %v173 = vld [vmem:[%s1 + $0x10] sm:$0xff]
        %v174 = vld [vmem:[%s1 + $0x18] sm:$0xff]
        %v175 = vld [vmem:[%s1 + $0x20] sm:$0xff]
        %v176 = vld [vmem:[%s1 + $0x28] sm:$0xff]
        %v177 = vld [vmem:[%s1 + $0x30] sm:$0xff]
        %v178 = vld [vmem:[%s1 + $0x38] sm:$0xff]
        %v179 = vld [vmem:[%s1 + $0x40] sm:$0xff]
        %v180 = vld [vmem:[%s1 + $0x48] sm:$0xff]
        %v181 = vld [vmem:[%s1 + $0x50] sm:$0xff]
        %v182 = vld [vmem:[%s1 + $0x58] sm:$0xff]
        %v183 = vld [vmem:[%s1 + $0x60] sm:$0xff]
        %v184 = vld [vmem:[%s1 + $0x68] sm:$0xff]
        %v185 = vld [vmem:[%s1 + $0x70] sm:$0xff]
        %v186 = vld [vmem:[%s1 + $0x78] sm:$0xff]
        %v187 = vld [vmem:[%s1 + $0x80] sm:$0xff]
        %v188 = vld [vmem:[%s1 + $0x88] sm:$0xff]
        %v189 = vld [vmem:[%s1 + $0x90] sm:$0xff]
        %v190 = vld [vmem:[%s1 + $0x98] sm:$0xff]
        %v191 = vld [vmem:[%s1 + $0xa0] sm:$0xff]
        %v192 = vld [vmem:[%s1 + $0xa8] sm:$0xff]
        %v193 = vld [vmem:[%s1 + $0xb0] sm:$0xff]
        %v194 = vld [vmem:[%s1 + $0xb8] sm:$0xff]
        %v195 = vld [vmem:[%s1 + $0xc0] sm:$0xff]
        %v196 = vld [vmem:[%s1 + $0xc8] sm:$0xff]
        %v197 = vld [vmem:[%s1 + $0xd0] sm:$0xff]
        %v198 = vld [vmem:[%s1 + $0xd8] sm:$0xff]
        %v199 = vld [vmem:[%s1 + $0xe0] sm:$0xff]
        %v200 = vld [vmem:[%s1 + $0xe8] sm:$0xff]
        %v201 = vld [vmem:[%s1 + $0xf0] sm:$0xff]
        %v202 = vld [vmem:[%s1 + $0xf8] sm:$0x7]
        %v203 = vld [vmem:[%s2] sm:$0x1]
        %v205 = vperm.slane %v203, 0
        %vm207 = vcmask 1006592
        %v209 = vsel %vm207, %v170, 0
        %vm211 = vcmask 1042432
        %v213 = vsel %vm211, %v202, 0
        %215 = vmatpush.msra.mxu0 %v186
        %216 = vmatpush.msra.mxu0 %v185
        %217 = vmatpush.msra.mxu0 %v184
        %218 = vmatpush.msra.mxu0 %v183
        %219 = vmatpush.msra.mxu0 %v182
        %220 = vmatpush.msra.mxu0 %v181
        %221 = vmatpush.msra.mxu0 %v180
        %222 = vmatpush.msra.mxu0 %v179
        %223 = vmatpush.msra.mxu0 %v178
        %224 = vmatpush.msra.mxu0 %v177
        %225 = vmatpush.msra.mxu0 %v176
        %226 = vmatpush.msra.mxu0 %v175
        %227 = vmatpush.msra.mxu0 %v174
        %228 = vmatpush.msra.mxu0 %v173
        %229 = vmatpush.msra.mxu0 %v172
        %230 = vmatpush.msra.mxu0 %v171
        %231 = vmatmul.f32.gmra.mxu0 %v169
        %v232 = vpop.f32.mrf.mxu0
        %v233 = vadd.f32 %v205, %v232
        %234 = vdwg.mxu0
        %235 = vmatpush.msra.mxu0 %v213
        %236 = vmatpush.msra.mxu0 %v201
        %237 = vmatpush.msra.mxu0 %v200
        %238 = vmatpush.msra.mxu0 %v199
        %239 = vmatpush.msra.mxu0 %v198
        %240 = vmatpush.msra.mxu0 %v197
        %241 = vmatpush.msra.mxu0 %v196
        %242 = vmatpush.msra.mxu0 %v195
        %243 = vmatpush.msra.mxu0 %v194
        %244 = vmatpush.msra.mxu0 %v193
        %245 = vmatpush.msra.mxu0 %v192
        %246 = vmatpush.msra.mxu0 %v191
        %247 = vmatpush.msra.mxu0 %v190
        %248 = vmatpush.msra.mxu0 %v189
        %249 = vmatpush.msra.mxu0 %v188
        %250 = vmatpush.msra.mxu0 %v187
        %251 = vmatmul.f32.gmra.mxu0 %v209
        %v252 = vpop.f32.mrf.mxu0
        %v253 = vadd.f32 %v233, %v252
        %254 = vdwg.mxu0
        %vm255 = vcmask 818176
        %256 = vst.msk [vmem:[%s163] sm:$0xff] %vm255, %v253
        %s257 = sand.u32 %s93, 1
        %s258 = scalar_lea.sflag [#allocation3], %s257
        %s259 = sand.u32 %s93, 1
        %s260 = smul.addr %s259, 8
        %s261 = scalar_lea.vmem [#allocation2], %s260
        // Predicated region
        $region33: #{tpu_custom_call.1} parent=31 // pred_check
          %p262 = pneg %p103
        $region34: #{tpu_custom_call.1} parent=31 // pred_check_branch
          %264 = sbr.rel (%p262) target = $region36
        $region35: #{tpu_custom_call.1} parent=31 // pred_region
          %266 = vsyncadd %s258, 0
          %s267 = smul.addr %s17, 8
          %s268 = scalar_lea.hbm %s3, %s267
          %s270 = sshll.u32 %s261, 4
          %s271 = int_to_ptr.vmem [resolvable:$true] %s270
          %s272 = sshll.u32 %s268, 4
          %s273 = int_to_ptr.hbm [resolvable:$true] %s272
          %275 = dma.vmem_to_hbm [thread:$0]  %s271, 128, %s273, %s258
        $region36: #{tpu_custom_call.1} parent=31 // pred_fallthru
          _
      $region32: #{tpu_custom_call.1} parent=5 // pred_fallthru
        _
      %p276 = scmp.le.s32.totalorder 2, %s12
      // Predicated region
      $region37: #{tpu_custom_call.1} parent=5 // pred_check
        %p277 = pneg %p276
      $region38: #{tpu_custom_call.1} parent=5 // pred_check_branch
        %279 = sbr.rel (%p277) target = $region40
      $region39: #{tpu_custom_call.1} parent=5 // pred_region
        %s280 = ssub.s32 %s12, 2
        // Predicated region
        $region41: #{tpu_custom_call.1} parent=39 // pred_check
          %p281 = pneg %p109
        $region42: #{tpu_custom_call.1} parent=39 // pred_check_branch
          %283 = sbr.rel (%p281) target = $region44
        $region43: #{tpu_custom_call.1} parent=39 // pred_region
          %s284 = sand.u32 %s94, 1
          %s285 = scalar_lea.sflag [#allocation3], %s284
          %s286 = sand.u32 %s94, 1
          %s287 = smul.addr %s286, 8
          %s288 = scalar_lea.vmem [#allocation2], %s287
          %290 = dma.done %s285, 128
        $region44: #{tpu_custom_call.1} parent=39 // pred_fallthru
          _
      $region40: #{tpu_custom_call.1} parent=5 // pred_fallthru
        _
    $region6: #{tpu_custom_call.1} parent=1 // loop_footer
      %s16 = sadd.s32 1, %s12
    $region7: #{tpu_custom_call.1} parent=1 // loop_footer_branch
      %11 = sbr.rel target = $region3
    $region8: #{tpu_custom_call.1} parent=1 // loop_exit
      _
    %291 = vsyncpa [#allocation3], 1
    %s292 = scalar_lea.sflag [#allocation3], 1
    %293 = vsyncpa %s292, 1

</llo_original>
